<compile_context>
chip_gen: v5e
topology: v5e:2x2
jax: 0.10.0
libtpu: 0.0.40
codegen_flags: <defaults>
</compile_context>

<pallas_src>
import math

import numpy as np

import jax
import jax.numpy as jnp
from jax.experimental import pallas as pl
from jax.experimental.pallas import tpu as pltpu


def _round_up(n, m):
    return ((n + m - 1) // m) * m


# --------------------------------------------------------------------------- #
# Kernel bodies
#   h_{l+1} = Linear2(GLU(h_l @ W1x[l] + cond1[l])) + h_l @ Wskip[l] + bskip[l]
#   where cond1[l] = cond @ W1c[l] + b1[l] is precomputed outside the kernel.
# --------------------------------------------------------------------------- #
def _resident_kernel(x_ref, cond1_ref, w1x_ref, w2s_ref, bsk_ref, o_ref):
    """All layers' weights resident in VMEM; layer chain unrolled in one call."""
    L = w1x_ref.shape[0]
    F = x_ref.shape[-1]
    h = x_ref[...]                                        # (Bp, F) f32
    for l in range(L):                                    # static unroll
        h_bf = h.astype(jnp.bfloat16)
        ag = (jnp.dot(h_bf, w1x_ref[l], preferred_element_type=jnp.float32)
              + cond1_ref[l])                             # (Bp, 2F) f32
        act = (ag[:, :F] * jax.nn.sigmoid(ag[:, F:])).astype(jnp.bfloat16)
        # Linear2 + skip: two dots against static slices of [W2; Wskip]
        # (no concat materialization, h_bf reused).
        h = (jnp.dot(act, w2s_ref[l, :F, :], preferred_element_type=jnp.float32)
             + jnp.dot(h_bf, w2s_ref[l, F:, :], preferred_element_type=jnp.float32)
             + bsk_ref[l])                                # (Bp, F) f32
    o_ref[...] = h


def _streamed_kernel(x_ref, cond1_ref, w1x_ref, w2s_ref, bsk_ref, o_ref):
    """One grid step == one block; per-layer weights streamed (double-buffered)."""
    l = pl.program_id(0)
    F = x_ref.shape[-1]

    @pl.when(l == 0)
    def _():
        o_ref[...] = x_ref[...]                           # seed running activation

    h = o_ref[...]                                        # VMEM-resident accumulator
    h_bf = h.astype(jnp.bfloat16)
    ag = (jnp.dot(h_bf, w1x_ref[0], preferred_element_type=jnp.float32)
          + cond1_ref[0])                                 # (Bp, 2F) f32
    act = (ag[:, :F] * jax.nn.sigmoid(ag[:, F:])).astype(jnp.bfloat16)
    o_ref[...] = (
        jnp.dot(act, w2s_ref[0, :F, :], preferred_element_type=jnp.float32)
        + jnp.dot(h_bf, w2s_ref[0, F:, :], preferred_element_type=jnp.float32)
        + bsk_ref[l])                                     # bskip: resident, indexed by l


# --------------------------------------------------------------------------- #
# Parameter init (PyTorch-Linear-like uniform bounds), stored transposed (in, out)
# --------------------------------------------------------------------------- #
def init_block_params(key, c_in, c_out, c_cond):
    ks = jax.random.split(key, 5)
    fan1 = c_in + c_cond
    bnd1 = 1.0 / math.sqrt(fan1)
    bnd2 = 1.0 / math.sqrt(c_out)
    bnds = 1.0 / math.sqrt(c_in)

    w1 = jax.random.uniform(ks[0], (fan1, 2 * c_out), jnp.float32, -bnd1, bnd1)
    b1 = jax.random.uniform(ks[1], (2 * c_out,), jnp.float32, -bnd1, bnd1)
    w2 = jax.random.uniform(ks[2], (c_out, c_out), jnp.float32, -bnd2, bnd2)
    wsk = jax.random.uniform(ks[3], (c_in, c_out), jnp.float32, -bnds, bnds)
    bsk = jax.random.uniform(ks[4], (c_out,), jnp.float32, -bnds, bnds)

    return {
        "w1x": w1[:c_in],        # (c_in,   2*c_out)  Linear1 rows that multiply x
        "w1c": w1[c_in:],        # (c_cond, 2*c_out)  Linear1 rows that multiply cond
        "b1": b1,                # (2*c_out,)
        "w2": w2,                # (c_out, c_out)     Linear2 (no bias)
        "wskip": wsk,            # (c_in, c_out)
        "bskip": bsk,            # (c_out,)
    }


def pack_params(layer_params, c_in0, c_out, F):
    """Zero-pad per-layer weights to lane-dense width F; built host-side in numpy."""
    L = len(layer_params)
    w1x = np.zeros((L, F, 2 * F), np.float32)
    w2s = np.zeros((L, 2 * F, F), np.float32)   # rows [0:F)=W2, rows [F:2F)=Wskip
    bsk = np.zeros((L, 1, F), np.float32)

    c_in = c_in0
    for l, p in enumerate(layer_params):
        w1x_l = np.asarray(p["w1x"], np.float32)
        # value half -> cols [0:c_out), gate half -> cols [F:F+c_out). Padding
        # rows/cols stay 0, so padded activation columns remain exactly zero.
        w1x[l, :c_in, :c_out] = w1x_l[:, :c_out]
        w1x[l, :c_in, F:F + c_out] = w1x_l[:, c_out:]
        w2s[l, :c_out, :c_out] = np.asarray(p["w2"], np.float32)
        w2s[l, F:F + c_in, :c_out] = np.asarray(p["wskip"], np.float32)
        bsk[l, 0, :c_out] = np.asarray(p["bskip"], np.float32)
        c_in = c_out

    return {
        "w1x": jnp.asarray(w1x).astype(jnp.bfloat16),   # bf16: MXU-native, half DMA bytes
        "w2s": jnp.asarray(w2s).astype(jnp.bfloat16),
        "bsk": jnp.asarray(bsk),                        # f32, added post-accumulation
    }


# --------------------------------------------------------------------------- #
# Wrapper
# --------------------------------------------------------------------------- #
def conditioned_resnet(x, cond, layer_params, *, force_streamed=False):
    """ConditionedRenset.forward, fused into a single pallas_call."""
    B, c_in0 = x.shape
    L = len(layer_params)
    c_out = layer_params[0]["w2"].shape[0]
    F = _round_up(max(c_in0, c_out), 128)
    Bp = _round_up(B, 8)

    packed = pack_params(layer_params, c_in0, c_out, F)

    # Precompute cond contribution (one batched einsum, same bf16 contract as the
    # kernel's matmuls):  cond1[l] = bf16(cond) @ bf16(W1c[l]) + b1[l]   -> f32.
    w1c_stack = jnp.stack([p["w1c"] for p in layer_params]).astype(jnp.bfloat16)
    b1_stack = jnp.stack([p["b1"] for p in layer_params])
    cond1_raw = (jnp.einsum("bc,lcn->lbn", cond.astype(jnp.bfloat16), w1c_stack,
                            preferred_element_type=jnp.float32)
                 + b1_stack[:, None, :])                   # (L, B, 2*c_out) f32
    cond1 = jnp.zeros((L, Bp, 2 * F), jnp.float32)
    cond1 = cond1.at[:, :B, :c_out].set(cond1_raw[:, :, :c_out])        # value half
    cond1 = cond1.at[:, :B, F:F + c_out].set(cond1_raw[:, :, c_out:])   # gate half

    x_pad = jnp.zeros((Bp, F), jnp.float32).at[:B, :c_in0].set(x)

    resident_bytes = (x_pad.size * 4 + cond1.size * 4
                      + packed["w1x"].size * 2 + packed["w2s"].size * 2
                      + packed["bsk"].size * 4 + Bp * F * 4)
    # Explicit VMEM limit; capped below v7x's 64 MiB physical VMEM.
    vmem_limit = int(min(48 << 20, max(16 << 20, 2 * resident_bytes + (2 << 20))))
    use_resident = (not force_streamed) and resident_bytes <= (12 << 20)

    if use_resident:
        # Everything fits: single invocation, weights loaded once, layers unrolled.
        out = pl.pallas_call(
            _resident_kernel,
            out_shape=jax.ShapeDtypeStruct((Bp, F), jnp.float32),
            grid=(1,),
            in_specs=[
                pl.BlockSpec((Bp, F), lambda i: (0, 0)),
                pl.BlockSpec((L, Bp, 2 * F), lambda i: (0, 0, 0)),
                pl.BlockSpec((L, F, 2 * F), lambda i: (0, 0, 0)),
                pl.BlockSpec((L, 2 * F, F), lambda i: (0, 0, 0)),
                pl.BlockSpec((L, 1, F), lambda i: (0, 0, 0)),
            ],
            out_specs=pl.BlockSpec((Bp, F), lambda i: (0, 0)),
            compiler_params=pltpu.CompilerParams(
                dimension_semantics=("arbitrary",),
                vmem_limit_bytes=vmem_limit),
        )(x_pad, cond1, packed["w1x"], packed["w2s"], packed["bsk"])
    else:
        # Weights too large to be resident: stream per-layer blocks, layer axis
        # is a sequential dependency chain ("arbitrary"); bskip stays resident.
        # TODO(synk): for large real-world B on v7x, add a leading batch grid axis
        #             marked "parallel" to shard batch tiles across the 2 TCs.
        out = pl.pallas_call(
            _streamed_kernel,
            out_shape=jax.ShapeDtypeStruct((Bp, F), jnp.float32),
            grid=(L,),
            in_specs=[
                pl.BlockSpec((Bp, F), lambda l: (0, 0)),             # x (used at l==0)
                pl.BlockSpec((1, Bp, 2 * F), lambda l: (l, 0, 0)),   # cond1[l]
                pl.BlockSpec((1, F, 2 * F), lambda l: (l, 0, 0)),    # W1x[l]
                pl.BlockSpec((1, 2 * F, F), lambda l: (l, 0, 0)),    # [W2; Wskip][l]
                pl.BlockSpec((L, 1, F), lambda l: (0, 0, 0)),        # bskip (resident)
            ],
            out_specs=pl.BlockSpec((Bp, F), lambda l: (0, 0)),       # resident accumulator
            compiler_params=pltpu.CompilerParams(
                dimension_semantics=("arbitrary",),
                vmem_limit_bytes=vmem_limit),
        )(x_pad, cond1, packed["w1x"], packed["w2s"], packed["bsk"])

    # Padded rows/cols contain garbage (bias accumulation in padded batch rows);
    # they are sliced off here — do not reuse the padded buffer downstream.
    return out[:B, :c_out]


# --------------------------------------------------------------------------- #
# Pure-JAX reference (same math, same bf16 matmul operands) for correctness
# --------------------------------------------------------------------------- #
def _bf16_dot(a, w):
    return jnp.dot(a.astype(jnp.bfloat16), w.astype(jnp.bfloat16),
                   preferred_element_type=jnp.float32)


def block_ref(x, cond, p):
    c_out = p["w2"].shape[0]
    ag = _bf16_dot(x, p["w1x"]) + _bf16_dot(cond, p["w1c"]) + p["b1"][None, :]
    a, g = ag[:, :c_out], ag[:, c_out:]
    act = a * jax.nn.sigmoid(g)
    return _bf16_dot(act, p["w2"]) + _bf16_dot(x, p["wskip"]) + p["bskip"][None, :]


def resnet_ref(x, cond, layer_params):
    out = x
    for p in layer_params:
        out = block_ref(out, cond, p)
    return out


if __name__ == "__main__":
    B, C_IN, C_OUT, C_COND, N_LAYERS = 8, 16, 32, 8, 3

    key = jax.random.PRNGKey(0)
    kx, kc, kp = jax.random.split(key, 3)
    x = jax.random.normal(kx, (B, C_IN), jnp.float32)
    cond = jax.random.normal(kc, (B, C_COND), jnp.float32)

    layer_params = []
    c_in = C_IN
    for lk in jax.random.split(kp, N_LAYERS):
        layer_params.append(init_block_params(lk, c_in, C_OUT, C_COND))
        c_in = C_OUT

    ref = resnet_ref(x, cond, layer_params)

    # Resident (default, weights fit in VMEM) path.
    out_res = jax.block_until_ready(conditioned_resnet(x, cond, layer_params))
    assert out_res.shape == (B, C_OUT)
    assert jnp.allclose(out_res, ref, atol=2e-2, rtol=2e-2), "resident path mismatch"

    # Streamed (grid=(L,)) fallback path — exercised explicitly for coverage.
    out_str = jax.block_until_ready(
        conditioned_resnet(x, cond, layer_params, force_streamed=True))
    assert out_str.shape == (B, C_OUT)
    assert jnp.allclose(out_str, ref, atol=2e-2, rtol=2e-2), "streamed path mismatch"

    print("KERNEL_OK")
</pallas_src>

<mosaic_0001>
module attributes {stable_mosaic.version = 11 : i64} {
  func.func @_resident_kernel(%arg0: i32, %arg1: memref<8x128xf32, #tpu.memory_space<vmem>>, %arg2: memref<3x8x256xf32, #tpu.memory_space<vmem>>, %arg3: memref<3x128x256xbf16, #tpu.memory_space<vmem>>, %arg4: memref<3x256x128xbf16, #tpu.memory_space<vmem>>, %arg5: memref<3x1x128xf32, #tpu.memory_space<vmem>>, %arg6: memref<8x128xf32, #tpu.memory_space<vmem>>) attributes {dimension_semantics = [#tpu.dimension_semantics<arbitrary>], iteration_bounds = array<i64: 1>, scalar_prefetch = 0 : i64, scratch_operands = 0 : i64, tpu.core_type = #tpu.core_type<tc>, window_params = [{pipeline_mode = #tpu.pipeline_mode<synchronous>, transform_indices = @transform_0, window_bounds = array<i64: 8, 128>}, {pipeline_mode = #tpu.pipeline_mode<synchronous>, transform_indices = @transform_1, window_bounds = array<i64: 3, 8, 256>}, {pipeline_mode = #tpu.pipeline_mode<synchronous>, transform_indices = @transform_2, window_bounds = array<i64: 3, 128, 256>}, {pipeline_mode = #tpu.pipeline_mode<synchronous>, transform_indices = @transform_3, window_bounds = array<i64: 3, 256, 128>}, {pipeline_mode = #tpu.pipeline_mode<synchronous>, transform_indices = @transform_4, window_bounds = array<i64: 3, 1, 128>}, {pipeline_mode = #tpu.pipeline_mode<synchronous>, transform_indices = @transform_5, window_bounds = array<i64: 8, 128>}]} {
    %c0 = arith.constant 0 : index
    %c0_0 = arith.constant 0 : index
    %0 = vector.load %arg1[%c0, %c0_0] : memref<8x128xf32, #tpu.memory_space<vmem>>, vector<8x128xf32>
    %1 = arith.truncf %0 : vector<8x128xf32> to vector<8x128xbf16>
    %c0_1 = arith.constant 0 : index
    %c0_2 = arith.constant 0 : index
    %c0_3 = arith.constant 0 : index
    %2 = vector.load %arg3[%c0_1, %c0_2, %c0_3] : memref<3x128x256xbf16, #tpu.memory_space<vmem>>, vector<1x128x256xbf16>
    %3 = vector.shape_cast %2 : vector<1x128x256xbf16> to vector<128x256xbf16>
    %cst = arith.constant dense<0.000000e+00> : vector<8x256xf32>
    %4 = tpu.matmul %1, %3, %cst {dimension_numbers = #tpu.dot_dimension_numbers<[1], [0], [0], [1], [0, 0, 1, 1], [], []>} : vector<8x128xbf16>, vector<128x256xbf16>, vector<8x256xf32> -> vector<8x256xf32>
    %c0_4 = arith.constant 0 : index
    %c0_5 = arith.constant 0 : index
    %c0_6 = arith.constant 0 : index
    %5 = vector.load %arg2[%c0_4, %c0_5, %c0_6] : memref<3x8x256xf32, #tpu.memory_space<vmem>>, vector<1x8x256xf32>
    %6 = vector.shape_cast %5 : vector<1x8x256xf32> to vector<8x256xf32>
    %7 = arith.addf %4, %6 : vector<8x256xf32>
    %8 = vector.extract_strided_slice %7 {offsets = [0, 0], sizes = [8, 128], strides = [1, 1]} : vector<8x256xf32> to vector<8x128xf32>
    %9 = vector.extract_strided_slice %7 {offsets = [0, 128], sizes = [8, 128], strides = [1, 1]} : vector<8x256xf32> to vector<8x128xf32>
    %10 = arith.negf %9 : vector<8x128xf32>
    %11 = math.exp %10 : vector<8x128xf32>
    %cst_7 = arith.constant 1.000000e+00 : f32
    %12 = vector.broadcast %cst_7 : f32 to vector<8x128xf32>
    %13 = arith.addf %12, %11 : vector<8x128xf32>
    %14 = arith.divf %12, %13 : vector<8x128xf32>
    %15 = arith.mulf %8, %14 : vector<8x128xf32>
    %16 = arith.truncf %15 : vector<8x128xf32> to vector<8x128xbf16>
    %c0_8 = arith.constant 0 : index
    %c0_9 = arith.constant 0 : index
    %c0_10 = arith.constant 0 : index
    %17 = vector.load %arg4[%c0_8, %c0_9, %c0_10] : memref<3x256x128xbf16, #tpu.memory_space<vmem>>, vector<1x128x128xbf16>
    %18 = vector.shape_cast %17 : vector<1x128x128xbf16> to vector<128x128xbf16>
    %cst_11 = arith.constant dense<0.000000e+00> : vector<8x128xf32>
    %19 = tpu.matmul %16, %18, %cst_11 {dimension_numbers = #tpu.dot_dimension_numbers<[1], [0], [0], [1], [0, 0, 1, 1], [], []>} : vector<8x128xbf16>, vector<128x128xbf16>, vector<8x128xf32> -> vector<8x128xf32>
    %c0_12 = arith.constant 0 : index
    %c128 = arith.constant 128 : index
    %c0_13 = arith.constant 0 : index
    %20 = vector.load %arg4[%c0_12, %c128, %c0_13] : memref<3x256x128xbf16, #tpu.memory_space<vmem>>, vector<1x128x128xbf16>
    %21 = vector.shape_cast %20 : vector<1x128x128xbf16> to vector<128x128xbf16>
    %cst_14 = arith.constant dense<0.000000e+00> : vector<8x128xf32>
    %22 = tpu.matmul %1, %21, %cst_14 {dimension_numbers = #tpu.dot_dimension_numbers<[1], [0], [0], [1], [0, 0, 1, 1], [], []>} : vector<8x128xbf16>, vector<128x128xbf16>, vector<8x128xf32> -> vector<8x128xf32>
    %23 = arith.addf %19, %22 : vector<8x128xf32>
    %c0_15 = arith.constant 0 : index
    %c0_16 = arith.constant 0 : index
    %c0_17 = arith.constant 0 : index
    %24 = vector.load %arg5[%c0_15, %c0_16, %c0_17] : memref<3x1x128xf32, #tpu.memory_space<vmem>>, vector<1x1x128xf32>
    %25 = vector.shape_cast %24 : vector<1x1x128xf32> to vector<1x128xf32>
    %26 = vector.broadcast %25 : vector<1x128xf32> to vector<8x128xf32>
    %27 = arith.addf %23, %26 : vector<8x128xf32>
    %28 = arith.truncf %27 : vector<8x128xf32> to vector<8x128xbf16>
    %c1 = arith.constant 1 : index
    %c0_18 = arith.constant 0 : index
    %c0_19 = arith.constant 0 : index
    %29 = vector.load %arg3[%c1, %c0_18, %c0_19] : memref<3x128x256xbf16, #tpu.memory_space<vmem>>, vector<1x128x256xbf16>
    %30 = vector.shape_cast %29 : vector<1x128x256xbf16> to vector<128x256xbf16>
    %cst_20 = arith.constant dense<0.000000e+00> : vector<8x256xf32>
    %31 = tpu.matmul %28, %30, %cst_20 {dimension_numbers = #tpu.dot_dimension_numbers<[1], [0], [0], [1], [0, 0, 1, 1], [], []>} : vector<8x128xbf16>, vector<128x256xbf16>, vector<8x256xf32> -> vector<8x256xf32>
    %c1_21 = arith.constant 1 : index
    %c0_22 = arith.constant 0 : index
    %c0_23 = arith.constant 0 : index
    %32 = vector.load %arg2[%c1_21, %c0_22, %c0_23] : memref<3x8x256xf32, #tpu.memory_space<vmem>>, vector<1x8x256xf32>
    %33 = vector.shape_cast %32 : vector<1x8x256xf32> to vector<8x256xf32>
    %34 = arith.addf %31, %33 : vector<8x256xf32>
    %35 = vector.extract_strided_slice %34 {offsets = [0, 0], sizes = [8, 128], strides = [1, 1]} : vector<8x256xf32> to vector<8x128xf32>
    %36 = vector.extract_strided_slice %34 {offsets = [0, 128], sizes = [8, 128], strides = [1, 1]} : vector<8x256xf32> to vector<8x128xf32>
    %37 = arith.negf %36 : vector<8x128xf32>
    %38 = math.exp %37 : vector<8x128xf32>
    %cst_24 = arith.constant 1.000000e+00 : f32
    %39 = vector.broadcast %cst_24 : f32 to vector<8x128xf32>
    %40 = arith.addf %39, %38 : vector<8x128xf32>
    %41 = arith.divf %39, %40 : vector<8x128xf32>
    %42 = arith.mulf %35, %41 : vector<8x128xf32>
    %43 = arith.truncf %42 : vector<8x128xf32> to vector<8x128xbf16>
    %c1_25 = arith.constant 1 : index
    %c0_26 = arith.constant 0 : index
    %c0_27 = arith.constant 0 : index
    %44 = vector.load %arg4[%c1_25, %c0_26, %c0_27] : memref<3x256x128xbf16, #tpu.memory_space<vmem>>, vector<1x128x128xbf16>
    %45 = vector.shape_cast %44 : vector<1x128x128xbf16> to vector<128x128xbf16>
    %cst_28 = arith.constant dense<0.000000e+00> : vector<8x128xf32>
    %46 = tpu.matmul %43, %45, %cst_28 {dimension_numbers = #tpu.dot_dimension_numbers<[1], [0], [0], [1], [0, 0, 1, 1], [], []>} : vector<8x128xbf16>, vector<128x128xbf16>, vector<8x128xf32> -> vector<8x128xf32>
    %c1_29 = arith.constant 1 : index
    %c128_30 = arith.constant 128 : index
    %c0_31 = arith.constant 0 : index
    %47 = vector.load %arg4[%c1_29, %c128_30, %c0_31] : memref<3x256x128xbf16, #tpu.memory_space<vmem>>, vector<1x128x128xbf16>
    %48 = vector.shape_cast %47 : vector<1x128x128xbf16> to vector<128x128xbf16>
    %cst_32 = arith.constant dense<0.000000e+00> : vector<8x128xf32>
    %49 = tpu.matmul %28, %48, %cst_32 {dimension_numbers = #tpu.dot_dimension_numbers<[1], [0], [0], [1], [0, 0, 1, 1], [], []>} : vector<8x128xbf16>, vector<128x128xbf16>, vector<8x128xf32> -> vector<8x128xf32>
    %50 = arith.addf %46, %49 : vector<8x128xf32>
    %c1_33 = arith.constant 1 : index
    %c0_34 = arith.constant 0 : index
    %c0_35 = arith.constant 0 : index
    %51 = vector.load %arg5[%c1_33, %c0_34, %c0_35] : memref<3x1x128xf32, #tpu.memory_space<vmem>>, vector<1x1x128xf32>
    %52 = vector.shape_cast %51 : vector<1x1x128xf32> to vector<1x128xf32>
    %53 = vector.broadcast %52 : vector<1x128xf32> to vector<8x128xf32>
    %54 = arith.addf %50, %53 : vector<8x128xf32>
    %55 = arith.truncf %54 : vector<8x128xf32> to vector<8x128xbf16>
    %c2 = arith.constant 2 : index
    %c0_36 = arith.constant 0 : index
    %c0_37 = arith.constant 0 : index
    %56 = vector.load %arg3[%c2, %c0_36, %c0_37] : memref<3x128x256xbf16, #tpu.memory_space<vmem>>, vector<1x128x256xbf16>
    %57 = vector.shape_cast %56 : vector<1x128x256xbf16> to vector<128x256xbf16>
    %cst_38 = arith.constant dense<0.000000e+00> : vector<8x256xf32>
    %58 = tpu.matmul %55, %57, %cst_38 {dimension_numbers = #tpu.dot_dimension_numbers<[1], [0], [0], [1], [0, 0, 1, 1], [], []>} : vector<8x128xbf16>, vector<128x256xbf16>, vector<8x256xf32> -> vector<8x256xf32>
    %c2_39 = arith.constant 2 : index
    %c0_40 = arith.constant 0 : index
    %c0_41 = arith.constant 0 : index
    %59 = vector.load %arg2[%c2_39, %c0_40, %c0_41] : memref<3x8x256xf32, #tpu.memory_space<vmem>>, vector<1x8x256xf32>
    %60 = vector.shape_cast %59 : vector<1x8x256xf32> to vector<8x256xf32>
    %61 = arith.addf %58, %60 : vector<8x256xf32>
    %62 = vector.extract_strided_slice %61 {offsets = [0, 0], sizes = [8, 128], strides = [1, 1]} : vector<8x256xf32> to vector<8x128xf32>
    %63 = vector.extract_strided_slice %61 {offsets = [0, 128], sizes = [8, 128], strides = [1, 1]} : vector<8x256xf32> to vector<8x128xf32>
    %64 = arith.negf %63 : vector<8x128xf32>
    %65 = math.exp %64 : vector<8x128xf32>
    %cst_42 = arith.constant 1.000000e+00 : f32
    %66 = vector.broadcast %cst_42 : f32 to vector<8x128xf32>
    %67 = arith.addf %66, %65 : vector<8x128xf32>
    %68 = arith.divf %66, %67 : vector<8x128xf32>
    %69 = arith.mulf %62, %68 : vector<8x128xf32>
    %70 = arith.truncf %69 : vector<8x128xf32> to vector<8x128xbf16>
    %c2_43 = arith.constant 2 : index
    %c0_44 = arith.constant 0 : index
    %c0_45 = arith.constant 0 : index
    %71 = vector.load %arg4[%c2_43, %c0_44, %c0_45] : memref<3x256x128xbf16, #tpu.memory_space<vmem>>, vector<1x128x128xbf16>
    %72 = vector.shape_cast %71 : vector<1x128x128xbf16> to vector<128x128xbf16>
    %cst_46 = arith.constant dense<0.000000e+00> : vector<8x128xf32>
    %73 = tpu.matmul %70, %72, %cst_46 {dimension_numbers = #tpu.dot_dimension_numbers<[1], [0], [0], [1], [0, 0, 1, 1], [], []>} : vector<8x128xbf16>, vector<128x128xbf16>, vector<8x128xf32> -> vector<8x128xf32>
    %c2_47 = arith.constant 2 : index
    %c128_48 = arith.constant 128 : index
    %c0_49 = arith.constant 0 : index
    %74 = vector.load %arg4[%c2_47, %c128_48, %c0_49] : memref<3x256x128xbf16, #tpu.memory_space<vmem>>, vector<1x128x128xbf16>
    %75 = vector.shape_cast %74 : vector<1x128x128xbf16> to vector<128x128xbf16>
    %cst_50 = arith.constant dense<0.000000e+00> : vector<8x128xf32>
    %76 = tpu.matmul %55, %75, %cst_50 {dimension_numbers = #tpu.dot_dimension_numbers<[1], [0], [0], [1], [0, 0, 1, 1], [], []>} : vector<8x128xbf16>, vector<128x128xbf16>, vector<8x128xf32> -> vector<8x128xf32>
    %77 = arith.addf %73, %76 : vector<8x128xf32>
    %c2_51 = arith.constant 2 : index
    %c0_52 = arith.constant 0 : index
    %c0_53 = arith.constant 0 : index
    %78 = vector.load %arg5[%c2_51, %c0_52, %c0_53] : memref<3x1x128xf32, #tpu.memory_space<vmem>>, vector<1x1x128xf32>
    %79 = vector.shape_cast %78 : vector<1x1x128xf32> to vector<1x128xf32>
    %80 = vector.broadcast %79 : vector<1x128xf32> to vector<8x128xf32>
    %81 = arith.addf %77, %80 : vector<8x128xf32>
    %c0_54 = arith.constant 0 : index
    %c0_55 = arith.constant 0 : index
    %82 = vector.load %arg6[%c0_54, %c0_55] : memref<8x128xf32, #tpu.memory_space<vmem>>, vector<8x128xf32>
    tpu.vector_store %arg6[%c0_54, %c0_55], %81 {strides = array<i32>} : memref<8x128xf32, #tpu.memory_space<vmem>>, vector<8x128xf32>,
    return
  }
  func.func @transform_0(%arg0: i32) -> (i32, i32) {
    %c0_i32 = arith.constant 0 : i32
    %c0_i32_0 = arith.constant 0 : i32
    %c0_i32_1 = arith.constant 0 : i32
    return %c0_i32, %c0_i32_0 : i32, i32
  }
  func.func @transform_1(%arg0: i32) -> (i32, i32, i32) {
    %c0_i32 = arith.constant 0 : i32
    %c0_i32_0 = arith.constant 0 : i32
    %c0_i32_1 = arith.constant 0 : i32
    %c0_i32_2 = arith.constant 0 : i32
    return %c0_i32, %c0_i32_0, %c0_i32_1 : i32, i32, i32
  }
  func.func @transform_2(%arg0: i32) -> (i32, i32, i32) {
    %c0_i32 = arith.constant 0 : i32
    %c0_i32_0 = arith.constant 0 : i32
    %c0_i32_1 = arith.constant 0 : i32
    %c0_i32_2 = arith.constant 0 : i32
    return %c0_i32, %c0_i32_0, %c0_i32_1 : i32, i32, i32
  }
  func.func @transform_3(%arg0: i32) -> (i32, i32, i32) {
    %c0_i32 = arith.constant 0 : i32
    %c0_i32_0 = arith.constant 0 : i32
    %c0_i32_1 = arith.constant 0 : i32
    %c0_i32_2 = arith.constant 0 : i32
    return %c0_i32, %c0_i32_0, %c0_i32_1 : i32, i32, i32
  }
  func.func @transform_4(%arg0: i32) -> (i32, i32, i32) {
    %c0_i32 = arith.constant 0 : i32
    %c0_i32_0 = arith.constant 0 : i32
    %c0_i32_1 = arith.constant 0 : i32
    %c0_i32_2 = arith.constant 0 : i32
    return %c0_i32, %c0_i32_0, %c0_i32_1 : i32, i32, i32
  }
  func.func @transform_5(%arg0: i32) -> (i32, i32) {
    %c0_i32 = arith.constant 0 : i32
    %c0_i32_0 = arith.constant 0 : i32
    %c0_i32_1 = arith.constant 0 : i32
    return %c0_i32, %c0_i32_0 : i32, i32
  }
}

</mosaic_0001>

<llo_original>
// kernel: tpu_custom_call.1
$region0: #{tpu_custom_call.1}
  #allocation0 [shape = 'u32[]', space=smem, size = 0x4, offset = 0x4, fixed_abs, tag = 'smem constant byte address 0x4 - core index']
  #allocation1 [shape = 'u32[72,128]{1,0:T(1,128)}', space=vmem, size = 0x9000, scoped, tag = 'internal scratch']
  %s0 = inlined_call_operand.hbm [shape: f32[8,128], index: 0, kind: input, shape index: {}]
  %s1 = inlined_call_operand.hbm [shape: f32[3,8,256], index: 1, kind: input, shape index: {}]
  %s2 = inlined_call_operand.hbm [shape: bf16[3,128,256], index: 2, kind: input, shape index: {}]
  %s3 = inlined_call_operand.hbm [shape: bf16[3,256,128], index: 3, kind: input, shape index: {}]
  %s4 = inlined_call_operand.vmem [shape: f32[3,1,128], index: 4, kind: input, shape index: {}]
  %s5 = inlined_call_operand.hbm [shape: f32[8,128], index: 5, kind: output, shape index: {}]
  %s6 = sld [smem:[#allocation0]]
  $region46: #{tpu_custom_call.1} parent=0
    _
  %s8 = ssub.s32 1, %s6
  %s9 = scalar_select 0, %s8, %s6
  $region1: #{tpu_custom_call.1} parent=0
    #allocation2 [shape = 'u8[4096]{0}', space=vmem, size = 0x1000, scoped, tag = 'input window, operand 0, single buffered']
    #allocation3 [shape = 's32[1]{0}', space=sflag, size = 0x4, scoped, tag = 'scoped memory for tpu_custom_call.1']
    #allocation4 [shape = 's32[1]{0}', space=sflag, size = 0x4, scoped, tag = 'scoped memory for tpu_custom_call.1']
    #allocation5 [shape = 'u8[24576]{0}', space=vmem, size = 0x6000, scoped, tag = 'input window, operand 1, single buffered']
    #allocation6 [shape = 's32[1]{0}', space=sflag, size = 0x4, scoped, tag = 'scoped memory for tpu_custom_call.1']
    #allocation7 [shape = 'u8[196608]{0}', space=vmem, size = 0x30000, scoped, tag = 'input window, operand 2, single buffered']
    #allocation8 [shape = 'u8[196608]{0}', space=vmem, size = 0x30000, scoped, tag = 'input window, operand 3, single buffered']
    #allocation9 [shape = 's32[1]{0}', space=sflag, size = 0x4, scoped, tag = 'scoped memory for tpu_custom_call.1']
    #allocation10 [shape = 'u8[4096]{0}', space=vmem, size = 0x1000, scoped, tag = 'output window, operand 0, single buffered']
    %10 = vsyncpa [#allocation3], 0
    %11 = vsyncpa [#allocation6], 0
    %12 = vsyncpa [#allocation9], 0
    %13 = vsyncpa [#allocation4], 0
    // Predicated region
    $region2: #{tpu_custom_call.1} parent=1 // pred_check
      _
    $region3: #{tpu_custom_call.1} parent=1 // pred_check_branch
      %15 = sbr.rel (0) target = $region5
    $region4: #{tpu_custom_call.1} parent=1 // pred_region
      %17 = vsyncadd [#allocation3], 0
      %s19 = sshll.u32 %s0, 4
      %s20 = int_to_ptr.hbm [resolvable:$true] %s19
      %s21 = sshll.u32 [#allocation2], 4
      %s22 = int_to_ptr.vmem [resolvable:$true] %s21
      %24 = dma.hbm_to_vmem [thread:$0]  %s20, 128, %s22, [#allocation3]
    $region5: #{tpu_custom_call.1} parent=1 // pred_fallthru
      _
    // Predicated region
    $region6: #{tpu_custom_call.1} parent=1 // pred_check
      _
    $region7: #{tpu_custom_call.1} parent=1 // pred_check_branch
      %26 = sbr.rel (0) target = $region9
    $region8: #{tpu_custom_call.1} parent=1 // pred_region
      %28 = vsyncadd [#allocation6], 0
      %s29 = sshll.u32 %s1, 4
      %s30 = int_to_ptr.hbm [resolvable:$true] %s29
      %s31 = sshll.u32 [#allocation5], 4
      %s32 = int_to_ptr.vmem [resolvable:$true] %s31
      %37 = dma.hbm_to_vmem [thread:$0]  %s30, 768, %s32, [#allocation6], 256, 256, 16
    $region9: #{tpu_custom_call.1} parent=1 // pred_fallthru
      _
    // Predicated region
    $region10: #{tpu_custom_call.1} parent=1 // pred_check
      _
    $region11: #{tpu_custom_call.1} parent=1 // pred_check_branch
      %39 = sbr.rel (0) target = $region13
    $region12: #{tpu_custom_call.1} parent=1 // pred_region
      %41 = vsyncadd [#allocation6], 0
      %s42 = sshll.u32 %s2, 4
      %s43 = int_to_ptr.hbm [resolvable:$true] %s42
      %s44 = sshll.u32 [#allocation7], 4
      %s45 = int_to_ptr.vmem [resolvable:$true] %s44
      %50 = dma.hbm_to_vmem [thread:$0]  %s43, 6144, %s45, [#allocation6], 128, 128, 8
    $region13: #{tpu_custom_call.1} parent=1 // pred_fallthru
      _
    // Predicated region
    $region14: #{tpu_custom_call.1} parent=1 // pred_check
      _
    $region15: #{tpu_custom_call.1} parent=1 // pred_check_branch
      %52 = sbr.rel (0) target = $region17
    $region16: #{tpu_custom_call.1} parent=1 // pred_region
      %54 = vsyncadd [#allocation9], 0
      %s55 = sshll.u32 %s3, 4
      %s56 = int_to_ptr.hbm [resolvable:$true] %s55
      %s57 = sshll.u32 [#allocation8], 4
      %s58 = int_to_ptr.vmem [resolvable:$true] %s57
      %63 = dma.hbm_to_vmem [thread:$0]  %s56, 6144, %s58, [#allocation9], 64, 64, 4
    $region17: #{tpu_custom_call.1} parent=1 // pred_fallthru
      _
    // Predicated region
    $region18: #{tpu_custom_call.1} parent=1 // pred_check
      _
    $region19: #{tpu_custom_call.1} parent=1 // pred_check_branch
      %65 = sbr.rel (0) target = $region21
    $region20: #{tpu_custom_call.1} parent=1 // pred_region
      _
    $region21: #{tpu_custom_call.1} parent=1 // pred_fallthru
      _
    // Predicated region
    $region22: #{tpu_custom_call.1} parent=1 // pred_check
      _
    $region23: #{tpu_custom_call.1} parent=1 // pred_check_branch
      %67 = sbr.rel (0) target = $region25
    $region24: #{tpu_custom_call.1} parent=1 // pred_region
      %69 = dma.done [#allocation3], 128
    $region25: #{tpu_custom_call.1} parent=1 // pred_fallthru
      _
    // Predicated region
    $region26: #{tpu_custom_call.1} parent=1 // pred_check
      _
    $region27: #{tpu_custom_call.1} parent=1 // pred_check_branch
      %71 = sbr.rel (0) target = $region29
    $region28: #{tpu_custom_call.1} parent=1 // pred_region
      %73 = dma.done [#allocation6], 768
    $region29: #{tpu_custom_call.1} parent=1 // pred_fallthru
      _
    // Predicated region
    $region30: #{tpu_custom_call.1} parent=1 // pred_check
      _
    $region31: #{tpu_custom_call.1} parent=1 // pred_check_branch
      %75 = sbr.rel (0) target = $region33
    $region32: #{tpu_custom_call.1} parent=1 // pred_region
      %77 = dma.done [#allocation6], 6144
    $region33: #{tpu_custom_call.1} parent=1 // pred_fallthru
      _
    // Predicated region
    $region34: #{tpu_custom_call.1} parent=1 // pred_check
      _
    $region35: #{tpu_custom_call.1} parent=1 // pred_check_branch
      %79 = sbr.rel (0) target = $region37
    $region36: #{tpu_custom_call.1} parent=1 // pred_region
      %81 = dma.done [#allocation9], 6144
    $region37: #{tpu_custom_call.1} parent=1 // pred_fallthru
      _
    %v82 = vld [vmem:[#allocation2] sm:$0xff]
    %v83 = vpack.c.bf16 %v82, %v82
    %v84 = vld [vmem:[#allocation7] sm:$0xff]
    %v85 = vld [vmem:[#allocation7 + $0x8] sm:$0xff]
    %v86 = vld [vmem:[#allocation7 + $0x10] sm:$0xff]
    %v87 = vld [vmem:[#allocation7 + $0x18] sm:$0xff]
    %v88 = vld [vmem:[#allocation7 + $0x20] sm:$0xff]
    %v89 = vld [vmem:[#allocation7 + $0x28] sm:$0xff]
    %v90 = vld [vmem:[#allocation7 + $0x30] sm:$0xff]
    %v91 = vld [vmem:[#allocation7 + $0x38] sm:$0xff]
    %v92 = vld [vmem:[#allocation7 + $0x40] sm:$0xff]
    %v93 = vld [vmem:[#allocation7 + $0x48] sm:$0xff]
    %v94 = vld [vmem:[#allocation7 + $0x50] sm:$0xff]
    %v95 = vld [vmem:[#allocation7 + $0x58] sm:$0xff]
    %v96 = vld [vmem:[#allocation7 + $0x60] sm:$0xff]
    %v97 = vld [vmem:[#allocation7 + $0x68] sm:$0xff]
    %v98 = vld [vmem:[#allocation7 + $0x70] sm:$0xff]
    %v99 = vld [vmem:[#allocation7 + $0x78] sm:$0xff]
    %v100 = vld [vmem:[#allocation5] sm:$0xff]
    %v101 = vld [vmem:[#allocation5 + $0x8] sm:$0xff]
    %v118 = vunpack.c.l.b16 %v84
    %v119 = vunpack.c.h.b16 %v84
    %v120 = vunpack.c.l.b16 %v85
    %v121 = vunpack.c.h.b16 %v85
    %v122 = vunpack.c.l.b16 %v86
    %v123 = vunpack.c.h.b16 %v86
    %v124 = vunpack.c.l.b16 %v87
    %v125 = vunpack.c.h.b16 %v87
    %v126 = vunpack.c.l.b16 %v88
    %v127 = vunpack.c.h.b16 %v88
    %v128 = vunpack.c.l.b16 %v89
    %v129 = vunpack.c.h.b16 %v89
    %v130 = vunpack.c.l.b16 %v90
    %v131 = vunpack.c.h.b16 %v90
    %v132 = vunpack.c.l.b16 %v91
    %v133 = vunpack.c.h.b16 %v91
    %v134 = vunpack.c.l.b16 %v92
    %v135 = vunpack.c.h.b16 %v92
    %v136 = vunpack.c.l.b16 %v93
    %v137 = vunpack.c.h.b16 %v93
    %v138 = vunpack.c.l.b16 %v94
    %v139 = vunpack.c.h.b16 %v94
    %v140 = vunpack.c.l.b16 %v95
    %v141 = vunpack.c.h.b16 %v95
    %v142 = vunpack.c.l.b16 %v96
    %v143 = vunpack.c.h.b16 %v96
    %v144 = vunpack.c.l.b16 %v97
    %v145 = vunpack.c.h.b16 %v97
    %v146 = vunpack.c.l.b16 %v98
    %v147 = vunpack.c.h.b16 %v98
    %v148 = vunpack.c.l.b16 %v99
    %v149 = vunpack.c.h.b16 %v99
    %v150 = vpack.c.b16 %v120, %v118
    %v151 = vpack.c.b16 %v121, %v119
    %v152 = vpack.c.b16 %v124, %v122
    %v153 = vpack.c.b16 %v125, %v123
    %v154 = vpack.c.b16 %v128, %v126
    %v155 = vpack.c.b16 %v129, %v127
    %v156 = vpack.c.b16 %v132, %v130
    %v157 = vpack.c.b16 %v133, %v131
    %v158 = vpack.c.b16 %v136, %v134
    %v159 = vpack.c.b16 %v137, %v135
    %v160 = vpack.c.b16 %v140, %v138
    %v161 = vpack.c.b16 %v141, %v139
    %v162 = vpack.c.b16 %v144, %v142
    %v163 = vpack.c.b16 %v145, %v143
    %v164 = vpack.c.b16 %v148, %v146
    %v165 = vpack.c.b16 %v149, %v147
    %182 = vmatpush.bf16.msra.mxu0 %v164
    %183 = vmatpush.bf16.msra.mxu0 %v162
    %184 = vmatpush.bf16.msra.mxu0 %v160
    %185 = vmatpush.bf16.msra.mxu0 %v158
    %186 = vmatpush.bf16.msra.mxu0 %v156
    %187 = vmatpush.bf16.msra.mxu0 %v154
    %188 = vmatpush.bf16.msra.mxu0 %v152
    %189 = vmatpush.bf16.msra.mxu0 %v150
    %190 = vmatmul.bf16.gmra.mxu0 %v83
    %v191 = vpop.f32.mrf.mxu0
    %v192 = vadd.f32 %v100, %v191
    %v193 = vpop.f32.mrf.mxu0
    %194 = vdwg.mxu0
    %195 = vmatpush.bf16.msra.mxu0 %v165
    %196 = vmatpush.bf16.msra.mxu0 %v163
    %197 = vmatpush.bf16.msra.mxu0 %v161
    %198 = vmatpush.bf16.msra.mxu0 %v159
    %199 = vmatpush.bf16.msra.mxu0 %v157
    %200 = vmatpush.bf16.msra.mxu0 %v155
    %201 = vmatpush.bf16.msra.mxu0 %v153
    %202 = vmatpush.bf16.msra.mxu0 %v151
    %203 = vmatmul.bf16.gmra.mxu0 %v83
    %v204 = vpop.f32.mrf.mxu0
    %v205 = vadd.f32 %v101, %v204
    %v206 = vpop.f32.mrf.mxu0
    %207 = vdwg.mxu0
    %v208 = vxor.u32 %v205, 2147483648
    %v209 = vmul.f32 %v208, 1.442695
    %v210 = vpow.pop %v209
    %v211 = vadd.f32 %v210, 1.0
    %v212 = vrcp.pop %v211
    %v213 = vmul.f32 %v211, %v212
    %v214 = vsub.f32 1.0, %v213
    %v215 = vmul.f32 %v212, %v214
    %v216 = vadd.f32 %v212, %v215
    %vm217 = vweird.f32 %v211
    %vm218 = vweird.f32 %v212
    %vm219 = vmor %vm217, %vm218
    %v220 = vsel %vm219, %v212, %v216
    %v221 = vand.u32 2147483647, %v211
    %vm222 = vcmp.eq.f32.partialorder %v221, 8.507059e+37
    %v223 = vand.u32 %v211, 2147483648
    %v224 = vor.u32 1.1754944e-38, %v223
    %v225 = vsel %vm222, %v224, %v220
    %v226 = vmul.f32 1.0, %v225
    %v227 = vmul.f32 %v192, %v226
    %v228 = vpack.c.bf16 %v227, %v227
    %v229 = vld [vmem:[#allocation8] sm:$0xf]
    %v230 = vld [vmem:[#allocation8 + $0x4] sm:$0xf]
    %v231 = vld [vmem:[#allocation8 + $0x8] sm:$0xf]
    %v232 = vld [vmem:[#allocation8 + $0xc] sm:$0xf]
    %v233 = vld [vmem:[#allocation8 + $0x10] sm:$0xf]
    %v234 = vld [vmem:[#allocation8 + $0x14] sm:$0xf]
    %v235 = vld [vmem:[#allocation8 + $0x18] sm:$0xf]
    %v236 = vld [vmem:[#allocation8 + $0x1c] sm:$0xf]
    %v237 = vld [vmem:[#allocation8 + $0x20] sm:$0xf]
    %v238 = vld [vmem:[#allocation8 + $0x24] sm:$0xf]
    %v239 = vld [vmem:[#allocation8 + $0x28] sm:$0xf]
    %v240 = vld [vmem:[#allocation8 + $0x2c] sm:$0xf]
    %v241 = vld [vmem:[#allocation8 + $0x30] sm:$0xf]
    %v242 = vld [vmem:[#allocation8 + $0x34] sm:$0xf]
    %v243 = vld [vmem:[#allocation8 + $0x38] sm:$0xf]
    %v244 = vld [vmem:[#allocation8 + $0x3c] sm:$0xf]
    %v245 = vld [vmem:[#allocation8 + $0x40] sm:$0xf]
    %v246 = vld [vmem:[#allocation8 + $0x44] sm:$0xf]
    %v247 = vld [vmem:[#allocation8 + $0x48] sm:$0xf]
    %v248 = vld [vmem:[#allocation8 + $0x4c] sm:$0xf]
    %v249 = vld [vmem:[#allocation8 + $0x50] sm:$0xf]
    %v250 = vld [vmem:[#allocation8 + $0x54] sm:$0xf]
    %v251 = vld [vmem:[#allocation8 + $0x58] sm:$0xf]
    %v252 = vld [vmem:[#allocation8 + $0x5c] sm:$0xf]
    %v253 = vld [vmem:[#allocation8 + $0x60] sm:$0xf]
    %v254 = vld [vmem:[#allocation8 + $0x64] sm:$0xf]
    %v255 = vld [vmem:[#allocation8 + $0x68] sm:$0xf]
    %v256 = vld [vmem:[#allocation8 + $0x6c] sm:$0xf]
    %v257 = vld [vmem:[#allocation8 + $0x70] sm:$0xf]
    %v258 = vld [vmem:[#allocation8 + $0x74] sm:$0xf]
    %v259 = vld [vmem:[#allocation8 + $0x78] sm:$0xf]
    %v260 = vld [vmem:[#allocation8 + $0x7c] sm:$0xf]
    %v277 = vunpack.c.l.b16 %v245
    %v278 = vunpack.c.l.b16 %v246
    %v279 = vunpack.c.l.b16 %v247
    %v280 = vunpack.c.l.b16 %v248
    %v281 = vunpack.c.l.b16 %v249
    %v282 = vunpack.c.l.b16 %v250
    %v283 = vunpack.c.l.b16 %v251
    %v284 = vunpack.c.l.b16 %v252
    %v285 = vunpack.c.l.b16 %v253
    %v286 = vunpack.c.l.b16 %v254
    %v287 = vunpack.c.l.b16 %v255
    %v288 = vunpack.c.l.b16 %v256
    %v289 = vunpack.c.l.b16 %v257
    %v290 = vunpack.c.l.b16 %v258
    %v291 = vunpack.c.l.b16 %v259
    %v292 = vunpack.c.l.b16 %v260
    %v293 = vpack.c.b16 %v278, %v277
    %v294 = vpack.c.b16 %v280, %v279
    %v295 = vpack.c.b16 %v282, %v281
    %v296 = vpack.c.b16 %v284, %v283
    %v297 = vpack.c.b16 %v286, %v285
    %v298 = vpack.c.b16 %v288, %v287
    %v299 = vpack.c.b16 %v290, %v289
    %v300 = vpack.c.b16 %v292, %v291
    %309 = vmatpush.bf16.msra.mxu0 %v300
    %310 = vmatpush.bf16.msra.mxu0 %v299
    %311 = vmatpush.bf16.msra.mxu0 %v298
    %312 = vmatpush.bf16.msra.mxu0 %v297
    %313 = vmatpush.bf16.msra.mxu0 %v296
    %314 = vmatpush.bf16.msra.mxu0 %v295
    %315 = vmatpush.bf16.msra.mxu0 %v294
    %316 = vmatpush.bf16.msra.mxu0 %v293
    %317 = vmatmul.bf16.gmra.mxu0 %v83
    %v318 = vpop.f32.mrf.mxu0
    %v319 = vadd.f32 0.0, %v318
    %v320 = vpop.f32.mrf.mxu0
    %321 = vdwg.mxu0
    %v338 = vunpack.c.l.b16 %v229
    %v339 = vunpack.c.l.b16 %v230
    %v340 = vunpack.c.l.b16 %v231
    %v341 = vunpack.c.l.b16 %v232
    %v342 = vunpack.c.l.b16 %v233
    %v343 = vunpack.c.l.b16 %v234
    %v344 = vunpack.c.l.b16 %v235
    %v345 = vunpack.c.l.b16 %v236
    %v346 = vunpack.c.l.b16 %v237
    %v347 = vunpack.c.l.b16 %v238
    %v348 = vunpack.c.l.b16 %v239
    %v349 = vunpack.c.l.b16 %v240
    %v350 = vunpack.c.l.b16 %v241
    %v351 = vunpack.c.l.b16 %v242
    %v352 = vunpack.c.l.b16 %v243
    %v353 = vunpack.c.l.b16 %v244
    %v354 = vpack.c.b16 %v339, %v338
    %v355 = vpack.c.b16 %v341, %v340
    %v356 = vpack.c.b16 %v343, %v342
    %v357 = vpack.c.b16 %v345, %v344
    %v358 = vpack.c.b16 %v347, %v346
    %v359 = vpack.c.b16 %v349, %v348
    %v360 = vpack.c.b16 %v351, %v350
    %v361 = vpack.c.b16 %v353, %v352
    %370 = vmatpush.bf16.msra.mxu0 %v361
    %371 = vmatpush.bf16.msra.mxu0 %v360
    %372 = vmatpush.bf16.msra.mxu0 %v359
    %373 = vmatpush.bf16.msra.mxu0 %v358
    %374 = vmatpush.bf16.msra.mxu0 %v357
    %375 = vmatpush.bf16.msra.mxu0 %v356
    %376 = vmatpush.bf16.msra.mxu0 %v355
    %377 = vmatpush.bf16.msra.mxu0 %v354
    %378 = vmatmul.bf16.gmra.mxu0 %v228
    %v379 = vpop.f32.mrf.mxu0
    %v380 = vadd.f32 %v319, %v379
    %v381 = vpop.f32.mrf.mxu0
    %382 = vdwg.mxu0
    %v383 = vld [vmem:[%s4] sm:$0x1]
    %v385 = vperm.slane %v383, 0
    %v387 = vadd.f32 %v380, %v385
    %v388 = vpack.c.bf16 %v387, %v387
    %s389 = scalar_lea.vmem [#allocation7], 128
    %v390 = vld [vmem:[%s389] sm:$0xff]
    %v391 = vld [vmem:[%s389 + $0x8] sm:$0xff]
    %v392 = vld [vmem:[%s389 + $0x10] sm:$0xff]
    %v393 = vld [vmem:[%s389 + $0x18] sm:$0xff]
    %v394 = vld [vmem:[%s389 + $0x20] sm:$0xff]
    %v395 = vld [vmem:[%s389 + $0x28] sm:$0xff]
    %v396 = vld [vmem:[%s389 + $0x30] sm:$0xff]
    %v397 = vld [vmem:[%s389 + $0x38] sm:$0xff]
    %v398 = vld [vmem:[%s389 + $0x40] sm:$0xff]
    %v399 = vld [vmem:[%s389 + $0x48] sm:$0xff]
    %v400 = vld [vmem:[%s389 + $0x50] sm:$0xff]
    %v401 = vld [vmem:[%s389 + $0x58] sm:$0xff]
    %v402 = vld [vmem:[%s389 + $0x60] sm:$0xff]
    %v403 = vld [vmem:[%s389 + $0x68] sm:$0xff]
    %v404 = vld [vmem:[%s389 + $0x70] sm:$0xff]
    %v405 = vld [vmem:[%s389 + $0x78] sm:$0xff]
    %s406 = scalar_lea.vmem [#allocation5], 16
    %v407 = vld [vmem:[%s406] sm:$0xff]
    %v408 = vld [vmem:[%s406 + $0x8] sm:$0xff]
    %v425 = vunpack.c.l.b16 %v390
    %v426 = vunpack.c.h.b16 %v390
    %v427 = vunpack.c.l.b16 %v391
    %v428 = vunpack.c.h.b16 %v391
    %v429 = vunpack.c.l.b16 %v392
    %v430 = vunpack.c.h.b16 %v392
    %v431 = vunpack.c.l.b16 %v393
    %v432 = vunpack.c.h.b16 %v393
    %v433 = vunpack.c.l.b16 %v394
    %v434 = vunpack.c.h.b16 %v394
    %v435 = vunpack.c.l.b16 %v395
    %v436 = vunpack.c.h.b16 %v395
    %v437 = vunpack.c.l.b16 %v396
    %v438 = vunpack.c.h.b16 %v396
    %v439 = vunpack.c.l.b16 %v397
    %v440 = vunpack.c.h.b16 %v397
    %v441 = vunpack.c.l.b16 %v398
    %v442 = vunpack.c.h.b16 %v398
    %v443 = vunpack.c.l.b16 %v399
    %v444 = vunpack.c.h.b16 %v399
    %v445 = vunpack.c.l.b16 %v400
    %v446 = vunpack.c.h.b16 %v400
    %v447 = vunpack.c.l.b16 %v401
    %v448 = vunpack.c.h.b16 %v401
    %v449 = vunpack.c.l.b16 %v402
    %v450 = vunpack.c.h.b16 %v402
    %v451 = vunpack.c.l.b16 %v403
    %v452 = vunpack.c.h.b16 %v403
    %v453 = vunpack.c.l.b16 %v404
    %v454 = vunpack.c.h.b16 %v404
    %v455 = vunpack.c.l.b16 %v405
    %v456 = vunpack.c.h.b16 %v405
    %v457 = vpack.c.b16 %v427, %v425
    %v458 = vpack.c.b16 %v428, %v426
    %v459 = vpack.c.b16 %v431, %v429
    %v460 = vpack.c.b16 %v432, %v430
    %v461 = vpack.c.b16 %v435, %v433
    %v462 = vpack.c.b16 %v436, %v434
    %v463 = vpack.c.b16 %v439, %v437
    %v464 = vpack.c.b16 %v440, %v438
    %v465 = vpack.c.b16 %v443, %v441
    %v466 = vpack.c.b16 %v444, %v442
    %v467 = vpack.c.b16 %v447, %v445
    %v468 = vpack.c.b16 %v448, %v446
    %v469 = vpack.c.b16 %v451, %v449
    %v470 = vpack.c.b16 %v452, %v450
    %v471 = vpack.c.b16 %v455, %v453
    %v472 = vpack.c.b16 %v456, %v454
    %489 = vmatpush.bf16.msra.mxu0 %v471
    %490 = vmatpush.bf16.msra.mxu0 %v469
    %491 = vmatpush.bf16.msra.mxu0 %v467
    %492 = vmatpush.bf16.msra.mxu0 %v465
    %493 = vmatpush.bf16.msra.mxu0 %v463
    %494 = vmatpush.bf16.msra.mxu0 %v461
    %495 = vmatpush.bf16.msra.mxu0 %v459
    %496 = vmatpush.bf16.msra.mxu0 %v457
    %497 = vmatmul.bf16.gmra.mxu0 %v388
    %v498 = vpop.f32.mrf.mxu0
    %v499 = vadd.f32 %v407, %v498
    %v500 = vpop.f32.mrf.mxu0
    %501 = vdwg.mxu0
    %502 = vmatpush.bf16.msra.mxu0 %v472
    %503 = vmatpush.bf16.msra.mxu0 %v470
    %504 = vmatpush.bf16.msra.mxu0 %v468
    %505 = vmatpush.bf16.msra.mxu0 %v466
    %506 = vmatpush.bf16.msra.mxu0 %v464
    %507 = vmatpush.bf16.msra.mxu0 %v462
    %508 = vmatpush.bf16.msra.mxu0 %v460
    %509 = vmatpush.bf16.msra.mxu0 %v458
    %510 = vmatmul.bf16.gmra.mxu0 %v388
    %v511 = vpop.f32.mrf.mxu0
    %v512 = vadd.f32 %v408, %v511
    %v513 = vpop.f32.mrf.mxu0
    %514 = vdwg.mxu0
    %v515 = vxor.u32 %v512, 2147483648
    %v516 = vmul.f32 %v515, 1.442695
    %v517 = vpow.pop %v516
    %v518 = vadd.f32 %v517, 1.0
    %v519 = vrcp.pop %v518
    %v520 = vmul.f32 %v518, %v519
    %v521 = vsub.f32 1.0, %v520
    %v522 = vmul.f32 %v519, %v521
    %v523 = vadd.f32 %v519, %v522
    %vm524 = vweird.f32 %v518
    %vm525 = vweird.f32 %v519
    %vm526 = vmor %vm524, %vm525
    %v527 = vsel %vm526, %v519, %v523
    %v528 = vand.u32 2147483647, %v518
    %vm529 = vcmp.eq.f32.partialorder %v528, 8.507059e+37
    %v530 = vand.u32 %v518, 2147483648
    %v531 = vor.u32 1.1754944e-38, %v530
    %v532 = vsel %vm529, %v531, %v527
    %v533 = vmul.f32 1.0, %v532
    %v534 = vmul.f32 %v499, %v533
    %v535 = vpack.c.bf16 %v534, %v534
    %s536 = scalar_lea.vmem [#allocation8], 128
    %v537 = vld [vmem:[%s536] sm:$0xf]
    %v538 = vld [vmem:[%s536 + $0x4] sm:$0xf]
    %v539 = vld [vmem:[%s536 + $0x8] sm:$0xf]
    %v540 = vld [vmem:[%s536 + $0xc] sm:$0xf]
    %v541 = vld [vmem:[%s536 + $0x10] sm:$0xf]
    %v542 = vld [vmem:[%s536 + $0x14] sm:$0xf]
    %v543 = vld [vmem:[%s536 + $0x18] sm:$0xf]
    %v544 = vld [vmem:[%s536 + $0x1c] sm:$0xf]
    %v545 = vld [vmem:[%s536 + $0x20] sm:$0xf]
    %v546 = vld [vmem:[%s536 + $0x24] sm:$0xf]
    %v547 = vld [vmem:[%s536 + $0x28] sm:$0xf]
    %v548 = vld [vmem:[%s536 + $0x2c] sm:$0xf]
    %v549 = vld [vmem:[%s536 + $0x30] sm:$0xf]
    %v550 = vld [vmem:[%s536 + $0x34] sm:$0xf]
    %v551 = vld [vmem:[%s536 + $0x38] sm:$0xf]
    %v552 = vld [vmem:[%s536 + $0x3c] sm:$0xf]
    %v553 = vld [vmem:[%s536 + $0x40] sm:$0xf]
    %v554 = vld [vmem:[%s536 + $0x44] sm:$0xf]
    %v555 = vld [vmem:[%s536 + $0x48] sm:$0xf]
    %v556 = vld [vmem:[%s536 + $0x4c] sm:$0xf]
    %v557 = vld [vmem:[%s536 + $0x50] sm:$0xf]
    %v558 = vld [vmem:[%s536 + $0x54] sm:$0xf]
    %v559 = vld [vmem:[%s536 + $0x58] sm:$0xf]
    %v560 = vld [vmem:[%s536 + $0x5c] sm:$0xf]
    %v561 = vld [vmem:[%s536 + $0x60] sm:$0xf]
    %v562 = vld [vmem:[%s536 + $0x64] sm:$0xf]
    %v563 = vld [vmem:[%s536 + $0x68] sm:$0xf]
    %v564 = vld [vmem:[%s536 + $0x6c] sm:$0xf]
    %v565 = vld [vmem:[%s536 + $0x70] sm:$0xf]
    %v566 = vld [vmem:[%s536 + $0x74] sm:$0xf]
    %v567 = vld [vmem:[%s536 + $0x78] sm:$0xf]
    %v568 = vld [vmem:[%s536 + $0x7c] sm:$0xf]
    %v585 = vunpack.c.l.b16 %v553
    %v586 = vunpack.c.l.b16 %v554
    %v587 = vunpack.c.l.b16 %v555
    %v588 = vunpack.c.l.b16 %v556
    %v589 = vunpack.c.l.b16 %v557
    %v590 = vunpack.c.l.b16 %v558
    %v591 = vunpack.c.l.b16 %v559
    %v592 = vunpack.c.l.b16 %v560
    %v593 = vunpack.c.l.b16 %v561
    %v594 = vunpack.c.l.b16 %v562
    %v595 = vunpack.c.l.b16 %v563
    %v596 = vunpack.c.l.b16 %v564
    %v597 = vunpack.c.l.b16 %v565
    %v598 = vunpack.c.l.b16 %v566
    %v599 = vunpack.c.l.b16 %v567
    %v600 = vunpack.c.l.b16 %v568
    %v601 = vpack.c.b16 %v586, %v585
    %v602 = vpack.c.b16 %v588, %v587
    %v603 = vpack.c.b16 %v590, %v589
    %v604 = vpack.c.b16 %v592, %v591
    %v605 = vpack.c.b16 %v594, %v593
    %v606 = vpack.c.b16 %v596, %v595
    %v607 = vpack.c.b16 %v598, %v597
    %v608 = vpack.c.b16 %v600, %v599
    %617 = vmatpush.bf16.msra.mxu0 %v608
    %618 = vmatpush.bf16.msra.mxu0 %v607
    %619 = vmatpush.bf16.msra.mxu0 %v606
    %620 = vmatpush.bf16.msra.mxu0 %v605
    %621 = vmatpush.bf16.msra.mxu0 %v604
    %622 = vmatpush.bf16.msra.mxu0 %v603
    %623 = vmatpush.bf16.msra.mxu0 %v602
    %624 = vmatpush.bf16.msra.mxu0 %v601
    %625 = vmatmul.bf16.gmra.mxu0 %v388
    %v626 = vpop.f32.mrf.mxu0
    %v627 = vadd.f32 0.0, %v626
    %v628 = vpop.f32.mrf.mxu0
    %629 = vdwg.mxu0
    %v646 = vunpack.c.l.b16 %v537
    %v647 = vunpack.c.l.b16 %v538
    %v648 = vunpack.c.l.b16 %v539
    %v649 = vunpack.c.l.b16 %v540
    %v650 = vunpack.c.l.b16 %v541
    %v651 = vunpack.c.l.b16 %v542
    %v652 = vunpack.c.l.b16 %v543
    %v653 = vunpack.c.l.b16 %v544
    %v654 = vunpack.c.l.b16 %v545
    %v655 = vunpack.c.l.b16 %v546
    %v656 = vunpack.c.l.b16 %v547
    %v657 = vunpack.c.l.b16 %v548
    %v658 = vunpack.c.l.b16 %v549
    %v659 = vunpack.c.l.b16 %v550
    %v660 = vunpack.c.l.b16 %v551
    %v661 = vunpack.c.l.b16 %v552
    %v662 = vpack.c.b16 %v647, %v646
    %v663 = vpack.c.b16 %v649, %v648
    %v664 = vpack.c.b16 %v651, %v650
    %v665 = vpack.c.b16 %v653, %v652
    %v666 = vpack.c.b16 %v655, %v654
    %v667 = vpack.c.b16 %v657, %v656
    %v668 = vpack.c.b16 %v659, %v658
    %v669 = vpack.c.b16 %v661, %v660
    %678 = vmatpush.bf16.msra.mxu0 %v669
    %679 = vmatpush.bf16.msra.mxu0 %v668
    %680 = vmatpush.bf16.msra.mxu0 %v667
    %681 = vmatpush.bf16.msra.mxu0 %v666
    %682 = vmatpush.bf16.msra.mxu0 %v665
    %683 = vmatpush.bf16.msra.mxu0 %v664
    %684 = vmatpush.bf16.msra.mxu0 %v663
    %685 = vmatpush.bf16.msra.mxu0 %v662
    %686 = vmatmul.bf16.gmra.mxu0 %v535
    %v687 = vpop.f32.mrf.mxu0
    %v688 = vadd.f32 %v627, %v687
    %v689 = vpop.f32.mrf.mxu0
    %690 = vdwg.mxu0
    %s691 = scalar_lea.vmem %s4, 1
    %v692 = vld [vmem:[%s691] sm:$0x1]
    %v694 = vperm.slane %v692, 0
    %v696 = vadd.f32 %v688, %v694
    %v697 = vpack.c.bf16 %v696, %v696
    %s698 = scalar_lea.vmem [#allocation7], 256
    %v699 = vld [vmem:[%s698] sm:$0xff]
    %v700 = vld [vmem:[%s698 + $0x8] sm:$0xff]
    %v701 = vld [vmem:[%s698 + $0x10] sm:$0xff]
    %v702 = vld [vmem:[%s698 + $0x18] sm:$0xff]
    %v703 = vld [vmem:[%s698 + $0x20] sm:$0xff]
    %v704 = vld [vmem:[%s698 + $0x28] sm:$0xff]
    %v705 = vld [vmem:[%s698 + $0x30] sm:$0xff]
    %v706 = vld [vmem:[%s698 + $0x38] sm:$0xff]
    %v707 = vld [vmem:[%s698 + $0x40] sm:$0xff]
    %v708 = vld [vmem:[%s698 + $0x48] sm:$0xff]
    %v709 = vld [vmem:[%s698 + $0x50] sm:$0xff]
    %v710 = vld [vmem:[%s698 + $0x58] sm:$0xff]
    %v711 = vld [vmem:[%s698 + $0x60] sm:$0xff]
    %v712 = vld [vmem:[%s698 + $0x68] sm:$0xff]
    %v713 = vld [vmem:[%s698 + $0x70] sm:$0xff]
    %v714 = vld [vmem:[%s698 + $0x78] sm:$0xff]
    %s715 = scalar_lea.vmem [#allocation5], 32
    %v716 = vld [vmem:[%s715] sm:$0xff]
    %v717 = vld [vmem:[%s715 + $0x8] sm:$0xff]
    %v734 = vunpack.c.l.b16 %v699
    %v735 = vunpack.c.h.b16 %v699
    %v736 = vunpack.c.l.b16 %v700
    %v737 = vunpack.c.h.b16 %v700
    %v738 = vunpack.c.l.b16 %v701
    %v739 = vunpack.c.h.b16 %v701
    %v740 = vunpack.c.l.b16 %v702
    %v741 = vunpack.c.h.b16 %v702
    %v742 = vunpack.c.l.b16 %v703
    %v743 = vunpack.c.h.b16 %v703
    %v744 = vunpack.c.l.b16 %v704
    %v745 = vunpack.c.h.b16 %v704
    %v746 = vunpack.c.l.b16 %v705
    %v747 = vunpack.c.h.b16 %v705
    %v748 = vunpack.c.l.b16 %v706
    %v749 = vunpack.c.h.b16 %v706
    %v750 = vunpack.c.l.b16 %v707
    %v751 = vunpack.c.h.b16 %v707
    %v752 = vunpack.c.l.b16 %v708
    %v753 = vunpack.c.h.b16 %v708
    %v754 = vunpack.c.l.b16 %v709
    %v755 = vunpack.c.h.b16 %v709
    %v756 = vunpack.c.l.b16 %v710
    %v757 = vunpack.c.h.b16 %v710
    %v758 = vunpack.c.l.b16 %v711
    %v759 = vunpack.c.h.b16 %v711
    %v760 = vunpack.c.l.b16 %v712
    %v761 = vunpack.c.h.b16 %v712
    %v762 = vunpack.c.l.b16 %v713
    %v763 = vunpack.c.h.b16 %v713
    %v764 = vunpack.c.l.b16 %v714
    %v765 = vunpack.c.h.b16 %v714
    %v766 = vpack.c.b16 %v736, %v734
    %v767 = vpack.c.b16 %v737, %v735
    %v768 = vpack.c.b16 %v740, %v738
    %v769 = vpack.c.b16 %v741, %v739
    %v770 = vpack.c.b16 %v744, %v742
    %v771 = vpack.c.b16 %v745, %v743
    %v772 = vpack.c.b16 %v748, %v746
    %v773 = vpack.c.b16 %v749, %v747
    %v774 = vpack.c.b16 %v752, %v750
    %v775 = vpack.c.b16 %v753, %v751
    %v776 = vpack.c.b16 %v756, %v754
    %v777 = vpack.c.b16 %v757, %v755
    %v778 = vpack.c.b16 %v760, %v758
    %v779 = vpack.c.b16 %v761, %v759
    %v780 = vpack.c.b16 %v764, %v762
    %v781 = vpack.c.b16 %v765, %v763
    %798 = vmatpush.bf16.msra.mxu0 %v780
    %799 = vmatpush.bf16.msra.mxu0 %v778
    %800 = vmatpush.bf16.msra.mxu0 %v776
    %801 = vmatpush.bf16.msra.mxu0 %v774
    %802 = vmatpush.bf16.msra.mxu0 %v772
    %803 = vmatpush.bf16.msra.mxu0 %v770
    %804 = vmatpush.bf16.msra.mxu0 %v768
    %805 = vmatpush.bf16.msra.mxu0 %v766
    %806 = vmatmul.bf16.gmra.mxu0 %v697
    %v807 = vpop.f32.mrf.mxu0
    %v808 = vadd.f32 %v716, %v807
    %v809 = vpop.f32.mrf.mxu0
    %810 = vdwg.mxu0
    %811 = vmatpush.bf16.msra.mxu0 %v781
    %812 = vmatpush.bf16.msra.mxu0 %v779
    %813 = vmatpush.bf16.msra.mxu0 %v777
    %814 = vmatpush.bf16.msra.mxu0 %v775
    %815 = vmatpush.bf16.msra.mxu0 %v773
    %816 = vmatpush.bf16.msra.mxu0 %v771
    %817 = vmatpush.bf16.msra.mxu0 %v769
    %818 = vmatpush.bf16.msra.mxu0 %v767
    %819 = vmatmul.bf16.gmra.mxu0 %v697
    %v820 = vpop.f32.mrf.mxu0
    %v821 = vadd.f32 %v717, %v820
    %v822 = vpop.f32.mrf.mxu0
    %823 = vdwg.mxu0
    %v824 = vxor.u32 %v821, 2147483648
    %v825 = vmul.f32 %v824, 1.442695
    %v826 = vpow.pop %v825
    %v827 = vadd.f32 %v826, 1.0
    %v828 = vrcp.pop %v827
    %v829 = vmul.f32 %v827, %v828
    %v830 = vsub.f32 1.0, %v829
    %v831 = vmul.f32 %v828, %v830
    %v832 = vadd.f32 %v828, %v831
    %vm833 = vweird.f32 %v827
    %vm834 = vweird.f32 %v828
    %vm835 = vmor %vm833, %vm834
    %v836 = vsel %vm835, %v828, %v832
    %v837 = vand.u32 2147483647, %v827
    %vm838 = vcmp.eq.f32.partialorder %v837, 8.507059e+37
    %v839 = vand.u32 %v827, 2147483648
    %v840 = vor.u32 1.1754944e-38, %v839
    %v841 = vsel %vm838, %v840, %v836
    %v842 = vmul.f32 1.0, %v841
    %v843 = vmul.f32 %v808, %v842
    %v844 = vpack.c.bf16 %v843, %v843
    %s845 = scalar_lea.vmem [#allocation8], 256
    %v846 = vld [vmem:[%s845] sm:$0xf]
    %v847 = vld [vmem:[%s845 + $0x4] sm:$0xf]
    %v848 = vld [vmem:[%s845 + $0x8] sm:$0xf]
    %v849 = vld [vmem:[%s845 + $0xc] sm:$0xf]
    %v850 = vld [vmem:[%s845 + $0x10] sm:$0xf]
    %v851 = vld [vmem:[%s845 + $0x14] sm:$0xf]
    %v852 = vld [vmem:[%s845 + $0x18] sm:$0xf]
    %v853 = vld [vmem:[%s845 + $0x1c] sm:$0xf]
    %v854 = vld [vmem:[%s845 + $0x20] sm:$0xf]
    %v855 = vld [vmem:[%s845 + $0x24] sm:$0xf]
    %v856 = vld [vmem:[%s845 + $0x28] sm:$0xf]
    %v857 = vld [vmem:[%s845 + $0x2c] sm:$0xf]
    %v858 = vld [vmem:[%s845 + $0x30] sm:$0xf]
    %v859 = vld [vmem:[%s845 + $0x34] sm:$0xf]
    %v860 = vld [vmem:[%s845 + $0x38] sm:$0xf]
    %v861 = vld [vmem:[%s845 + $0x3c] sm:$0xf]
    %v862 = vld [vmem:[%s845 + $0x40] sm:$0xf]
    %v863 = vld [vmem:[%s845 + $0x44] sm:$0xf]
    %v864 = vld [vmem:[%s845 + $0x48] sm:$0xf]
    %v865 = vld [vmem:[%s845 + $0x4c] sm:$0xf]
    %v866 = vld [vmem:[%s845 + $0x50] sm:$0xf]
    %v867 = vld [vmem:[%s845 + $0x54] sm:$0xf]
    %v868 = vld [vmem:[%s845 + $0x58] sm:$0xf]
    %v869 = vld [vmem:[%s845 + $0x5c] sm:$0xf]
    %v870 = vld [vmem:[%s845 + $0x60] sm:$0xf]
    %v871 = vld [vmem:[%s845 + $0x64] sm:$0xf]
    %v872 = vld [vmem:[%s845 + $0x68] sm:$0xf]
    %v873 = vld [vmem:[%s845 + $0x6c] sm:$0xf]
    %v874 = vld [vmem:[%s845 + $0x70] sm:$0xf]
    %v875 = vld [vmem:[%s845 + $0x74] sm:$0xf]
    %v876 = vld [vmem:[%s845 + $0x78] sm:$0xf]
    %v877 = vld [vmem:[%s845 + $0x7c] sm:$0xf]
    %v894 = vunpack.c.l.b16 %v862
    %v895 = vunpack.c.l.b16 %v863
    %v896 = vunpack.c.l.b16 %v864
    %v897 = vunpack.c.l.b16 %v865
    %v898 = vunpack.c.l.b16 %v866
    %v899 = vunpack.c.l.b16 %v867
    %v900 = vunpack.c.l.b16 %v868
    %v901 = vunpack.c.l.b16 %v869
    %v902 = vunpack.c.l.b16 %v870
    %v903 = vunpack.c.l.b16 %v871
    %v904 = vunpack.c.l.b16 %v872
    %v905 = vunpack.c.l.b16 %v873
    %v906 = vunpack.c.l.b16 %v874
    %v907 = vunpack.c.l.b16 %v875
    %v908 = vunpack.c.l.b16 %v876
    %v909 = vunpack.c.l.b16 %v877
    %v910 = vpack.c.b16 %v895, %v894
    %v911 = vpack.c.b16 %v897, %v896
    %v912 = vpack.c.b16 %v899, %v898
    %v913 = vpack.c.b16 %v901, %v900
    %v914 = vpack.c.b16 %v903, %v902
    %v915 = vpack.c.b16 %v905, %v904
    %v916 = vpack.c.b16 %v907, %v906
    %v917 = vpack.c.b16 %v909, %v908
    %926 = vmatpush.bf16.msra.mxu0 %v917
    %927 = vmatpush.bf16.msra.mxu0 %v916
    %928 = vmatpush.bf16.msra.mxu0 %v915
    %929 = vmatpush.bf16.msra.mxu0 %v914
    %930 = vmatpush.bf16.msra.mxu0 %v913
    %931 = vmatpush.bf16.msra.mxu0 %v912
    %932 = vmatpush.bf16.msra.mxu0 %v911
    %933 = vmatpush.bf16.msra.mxu0 %v910
    %934 = vmatmul.bf16.gmra.mxu0 %v697
    %v935 = vpop.f32.mrf.mxu0
    %v936 = vadd.f32 0.0, %v935
    %v937 = vpop.f32.mrf.mxu0
    %938 = vdwg.mxu0
    %v955 = vunpack.c.l.b16 %v846
    %v956 = vunpack.c.l.b16 %v847
    %v957 = vunpack.c.l.b16 %v848
    %v958 = vunpack.c.l.b16 %v849
    %v959 = vunpack.c.l.b16 %v850
    %v960 = vunpack.c.l.b16 %v851
    %v961 = vunpack.c.l.b16 %v852
    %v962 = vunpack.c.l.b16 %v853
    %v963 = vunpack.c.l.b16 %v854
    %v964 = vunpack.c.l.b16 %v855
    %v965 = vunpack.c.l.b16 %v856
    %v966 = vunpack.c.l.b16 %v857
    %v967 = vunpack.c.l.b16 %v858
    %v968 = vunpack.c.l.b16 %v859
    %v969 = vunpack.c.l.b16 %v860
    %v970 = vunpack.c.l.b16 %v861
    %v971 = vpack.c.b16 %v956, %v955
    %v972 = vpack.c.b16 %v958, %v957
    %v973 = vpack.c.b16 %v960, %v959
    %v974 = vpack.c.b16 %v962, %v961
    %v975 = vpack.c.b16 %v964, %v963
    %v976 = vpack.c.b16 %v966, %v965
    %v977 = vpack.c.b16 %v968, %v967
    %v978 = vpack.c.b16 %v970, %v969
    %987 = vmatpush.bf16.msra.mxu0 %v978
    %988 = vmatpush.bf16.msra.mxu0 %v977
    %989 = vmatpush.bf16.msra.mxu0 %v976
    %990 = vmatpush.bf16.msra.mxu0 %v975
    %991 = vmatpush.bf16.msra.mxu0 %v974
    %992 = vmatpush.bf16.msra.mxu0 %v973
    %993 = vmatpush.bf16.msra.mxu0 %v972
    %994 = vmatpush.bf16.msra.mxu0 %v971
    %995 = vmatmul.bf16.gmra.mxu0 %v844
    %v996 = vpop.f32.mrf.mxu0
    %v997 = vadd.f32 %v936, %v996
    %v998 = vpop.f32.mrf.mxu0
    %999 = vdwg.mxu0
    %s1000 = scalar_lea.vmem %s4, 2
    %v1001 = vld [vmem:[%s1000] sm:$0x1]
    %v1003 = vperm.slane %v1001, 0
    %v1005 = vadd.f32 %v997, %v1003
    %1006 = vst [vmem:[#allocation10] sm:$0xff] %v1005
    // Predicated region
    $region38: #{tpu_custom_call.1} parent=1 // pred_check
      _
    $region39: #{tpu_custom_call.1} parent=1 // pred_check_branch
      %1008 = sbr.rel (0) target = $region41
    $region40: #{tpu_custom_call.1} parent=1 // pred_region
      %1010 = vsyncadd [#allocation4], 0
      %s1012 = sshll.u32 [#allocation10], 4
      %s1013 = int_to_ptr.vmem [resolvable:$true] %s1012
      %s1014 = sshll.u32 %s5, 4
      %s1015 = int_to_ptr.hbm [resolvable:$true] %s1014
      %1017 = dma.vmem_to_hbm [thread:$0]  %s1013, 128, %s1015, [#allocation4]
    $region41: #{tpu_custom_call.1} parent=1 // pred_fallthru
      _
    // Predicated region
    $region42: #{tpu_custom_call.1} parent=1 // pred_check
      _
    $region43: #{tpu_custom_call.1} parent=1 // pred_check_branch
      %1019 = sbr.rel (0) target = $region45
    $region44: #{tpu_custom_call.1} parent=1 // pred_region
      %1021 = dma.done [#allocation4], 128
    $region45: #{tpu_custom_call.1} parent=1 // pred_fallthru
      _
    %1022 = vsyncpa [#allocation3], 1
    %1023 = vsyncpa [#allocation6], 1
    %1024 = vsyncpa [#allocation9], 1
    %1025 = vsyncpa [#allocation4], 1

</llo_original>
